<compile_context>
chip_gen: v6e
topology: v6e:2x2x1
jax: 0.10.0
libtpu: 0.0.40
codegen_flags: <defaults>
</compile_context>

<pallas_src>
import jax
import jax.numpy as jnp
from jax import lax
from jax.experimental import pallas as pl
from jax.experimental.pallas import tpu as pltpu

_G = 0.5
_OFF = ((0.0, 0.0), (_G, 0.0), (0.0, _G), (-_G, 0.0), (0.0, -_G))
_HALF_MAX = 65504.0          # torch.finfo(torch.half).max
_APAD = 8                    # anchor axis padded to one sublane tile


def _make_kernel(anchor_threshold, b, n_lanes):
    # Only Python scalars are closed over -> no captured jnp constants.
    thr = float(anchor_threshold)
    shape = (b, _APAD, n_lanes)

    def kernel(fm_ref, labels_ref, anch_ref, targets_ref, offsets_ref, scores_ref):
        # per-head feature-map size, read from SMEM (scalar prefetch)
        fm = fm_ref[pl.program_id(0)].astype(jnp.float32)

        def up(v):                       # (b, 1, NP) -> (b, 8, NP): sublane broadcast
            return jnp.broadcast_to(v, shape)

        cls = up(labels_ref[0])
        x_p = labels_ref[1] * fm
        y_p = labels_ref[2] * fm
        w_p = labels_ref[3] * fm
        h_p = labels_ref[4] * fm
        # two tiny (b,1,NP) divides instead of four full-size per-anchor divides
        inv_w_p = 1.0 / w_p
        inv_h_p = 1.0 / h_p
        x = up(x_p); y = up(y_p); w = up(w_p); hgt = up(h_p)

        aw = anch_ref[0]                 # (8, NP), zero-padded past A
        ah = anch_ref[1]
        inv_aw = anch_ref[2]
        inv_ah = anch_ref[3]

        # worse = max(w/aw, aw/w, h/ah, ah/h); padded anchors / padded labels
        # produce 0 / inf / nan and fail the threshold test, exactly like the
        # torch reference masks them out.
        worse = jnp.maximum(jnp.maximum(w * inv_aw, aw * up(inv_w_p)),
                            jnp.maximum(hgt * inv_ah, ah * up(inv_h_p)))

        # Faithful to the reference: torch.amax(...)[0] takes batch element 0's
        # mask and applies it to every batch element.
        m0 = worse[0]
        m0 = jnp.where(m0 != 0.0, m0, _HALF_MAX)
        mask = jnp.broadcast_to((m0 < thr)[None], shape)

        aidx = lax.broadcasted_iota(jnp.int32, shape, 1).astype(jnp.float32) + 1.0

        bt = [jnp.where(mask, v, 0.0) for v in (cls, x, y, w, hgt, aidx)]
        bx, by = bt[1], bt[2]
        inv_x = jnp.where(bx != 0.0, fm - bx, 0.0)
        inv_y = jnp.where(by != 0.0, fm - by, 0.0)

        def frac(v):                     # v % 1.0 for v >= 0 (avoids float rem)
            return v - jnp.floor(v)

        x_mask = (frac(bx) < _G) & (bx > 1.0)
        y_mask = (frac(by) < _G) & (by > 1.0)
        ix_mask = (frac(inv_x) < _G) & (inv_x > 1.0)
        iy_mask = (frac(inv_y) < _G) & (inv_y > 1.0)

        inds = (jnp.ones_like(x_mask), x_mask, y_mask, ix_mask, iy_mask)
        bt_stack = jnp.stack(bt, axis=0)                    # (6, b, 8, NP)

        for k in range(5):          # unrolled: centre + 4 neighbour offsets
            ind = inds[k]
            sel = jnp.where(ind[None], bt_stack, 0.0)       # (6, b, 8, NP)
            targets_ref[k] = sel                            # one wide block store
            scores_ref[k] = jnp.sum(sel, axis=0)            # per-row field sum
            ox, oy = _OFF[k]
            offsets_ref[k] = jnp.stack(
                [jnp.where(ind, ox, 0.0), jnp.where(ind, oy, 0.0)], axis=0)

    return kernel


class PreprocessTargetsPallas:
    """Mirror of the torch PreprocessTargets module (single precision)."""

    def __init__(self, strides, image_size, anchors, max_n_labels, anchor_threshold):
        self.strides = list(strides)
        self.train_input_sizes = [int(image_size // s) for s in strides]
        self.max_n_labels = [int(m) for m in max_n_labels]
        self.anchor_threshold = float(anchor_threshold)

        anchors = [jnp.asarray(a_i, jnp.float32) / float(s)
                   for a_i, s in zip(anchors, strides)]
        a = int(anchors[0].shape[0])
        assert all(int(anc.shape[0]) == a for anc in anchors) and a <= _APAD
        self.anchor_per_scale = a

        # (3, 4, 8): [aw, ah, 1/aw, 1/ah] per head, zero-padded so padded anchor
        # rows are masked out inside the kernel.
        base = []
        for anc in anchors:
            aw = jnp.zeros((_APAD,), jnp.float32).at[:a].set(anc[:, 0])
            ah = jnp.zeros((_APAD,), jnp.float32).at[:a].set(anc[:, 1])
            iaw = jnp.zeros((_APAD,), jnp.float32).at[:a].set(1.0 / anc[:, 0])
            iah = jnp.zeros((_APAD,), jnp.float32).at[:a].set(1.0 / anc[:, 1])
            base.append(jnp.stack([aw, ah, iaw, iah], axis=0))
        self._anchor_base = jnp.stack(base, axis=0)              # (3, 4, 8)
        self._fm_sizes = jnp.asarray(self.train_input_sizes, jnp.int32)   # (3,)

        # TODO(synk): auto_anchors=True branch (returns a single count) not
        # implemented; only the default training path is reproduced.
        self._fwd = jax.jit(self._forward)

    def _forward(self, real_labels):
        b, n, _ = real_labels.shape
        a = self.anchor_per_scale
        npad = max(128, ((n + 127) // 128) * 128)

        lab = jnp.transpose(real_labels.astype(jnp.float32), (2, 0, 1))   # (5,b,n)
        labels_planes = (jnp.zeros((5, b, 1, npad), jnp.float32)
                         .at[:, :, 0, :n].set(lab))
        anchor_planes = jnp.broadcast_to(self._anchor_base[:, :, :, None],
                                         (3, 4, _APAD, npad))

        kernel = _make_kernel(self.anchor_threshold, b, npad)
        grid_spec = pltpu.PrefetchScalarGridSpec(
            num_scalar_prefetch=1,
            grid=(3,),                                   # fused: one call, 3 heads
            in_specs=[
                pl.BlockSpec((5, b, 1, npad), lambda h, fm: (0, 0, 0, 0)),
                pl.BlockSpec((None, 4, _APAD, npad), lambda h, fm: (h, 0, 0, 0)),
            ],
            out_specs=(
                pl.BlockSpec((None, 5, 6, b, _APAD, npad),
                             lambda h, fm: (h, 0, 0, 0, 0, 0)),
                pl.BlockSpec((None, 5, 2, b, _APAD, npad),
                             lambda h, fm: (h, 0, 0, 0, 0, 0)),
                pl.BlockSpec((None, 5, b, _APAD, npad),
                             lambda h, fm: (h, 0, 0, 0, 0)),
            ),
        )
        targets_o, offsets_o, scores_o = pl.pallas_call(
            kernel,
            grid_spec=grid_spec,
            out_shape=(
                jax.ShapeDtypeStruct((3, 5, 6, b, _APAD, npad), jnp.float32),
                jax.ShapeDtypeStruct((3, 5, 2, b, _APAD, npad), jnp.float32),
                jax.ShapeDtypeStruct((3, 5, b, _APAD, npad), jnp.float32),
            ),
            compiler_params=pltpu.CompilerParams(
                dimension_semantics=("parallel",)),
        )(self._fm_sizes, labels_planes, anchor_planes)

        outs = []
        for h in range(3):
            outs.append(self._postprocess(
                targets_o[h], offsets_o[h], scores_o[h], b, n, a,
                self.train_input_sizes[h], self.max_n_labels[h]))
        return tuple(outs)

    @staticmethod
    def _postprocess(targets_h, offsets_h, scores_h, b, n, a, fm_size, max_n):
        # top-k over the (5, B, N, A) row-major flattening used by the torch
        # reference (only the 5*B*N*A valid entries; tiny transpose).
        sc = jnp.transpose(scores_h[:, :, :a, :n], (0, 1, 3, 2)).reshape(-1)
        _, idx = lax.top_k(sc, max_n)
        a_i = idx % a
        r = idx // a
        n_i = r % n
        r = r // n
        b_i = r % b
        k_i = r // b
        # field-major gather: touches only max_n * 6 elements
        tg = targets_h[k_i, :, b_i, a_i, n_i]                    # (max_n, 6)
        of = offsets_h[k_i, :, b_i, a_i, n_i]                    # (max_n, 2)

        classes = tg[:, 0:1]
        label_xy = tg[:, 1:3]
        label_wh = tg[:, 3:5]
        xy_ind = jnp.where(label_xy != 0.0, (label_xy - of).astype(jnp.int32), 0)
        # torch's in-place clamp_ on the permuted view also clamps the tensor
        # reused in t_boxes, so clamp before reusing it.
        xy_ind = jnp.clip(xy_ind, 0, fm_size - 1)
        x_ind = xy_ind[:, 0]
        y_ind = xy_ind[:, 1]
        # the reference hard-codes the upper clamp of 4
        anchor_ind = jnp.clip(tg[:, 5] - 1.0, 0.0, 4.0).astype(jnp.int32)
        t_boxes = jnp.concatenate(
            [classes, label_xy - xy_ind.astype(jnp.float32), label_wh], axis=-1)
        return anchor_ind, y_ind, x_ind, t_boxes

    def __call__(self, real_labels):
        return self._fwd(real_labels)


if __name__ == "__main__":
    key = jax.random.PRNGKey(0)
    b, n = 2, 8
    k1, k2 = jax.random.split(key)
    classes = jax.random.randint(k1, (b, n, 1), 0, 80).astype(jnp.float32)
    xywh = jax.random.uniform(k2, (b, n, 4), jnp.float32, 0.05, 0.95)
    labels = jnp.concatenate([classes, xywh], axis=-1)
    # Zero-pad the last label of each image (typical padded label tensor).
    labels = labels.at[:, -1, :].set(0.0)

    anchors = [
        [[12.0, 16.0], [19.0, 36.0], [40.0, 28.0]],        # p3
        [[36.0, 75.0], [76.0, 55.0], [72.0, 146.0]],       # p4
        [[142.0, 110.0], [192.0, 243.0], [459.0, 401.0]],  # p5
    ]
    max_n_labels = [12, 10, 8]
    model = PreprocessTargetsPallas(
        strides=[8, 16, 32],
        image_size=64,
        anchors=anchors,
        max_n_labels=max_n_labels,
        anchor_threshold=4.0,
    )

    out = jax.block_until_ready(model(labels))

    for (anchor_ind, y_ind, x_ind, t_boxes), mx in zip(out, max_n_labels):
        assert anchor_ind.shape == (mx,) and anchor_ind.dtype == jnp.int32
        assert y_ind.shape == (mx,) and x_ind.shape == (mx,)
        assert t_boxes.shape == (mx, 5) and t_boxes.dtype == jnp.float32
        assert bool(jnp.all(jnp.isfinite(t_boxes)))

    print("KERNEL_OK")
</pallas_src>

<mosaic_0001>
module attributes {stable_mosaic.version = 11 : i64} {
  func.func @kernel(%arg0: i32, %arg1: memref<3xi32, #tpu.memory_space<smem>>, %arg2: memref<5x2x1x128xf32, #tpu.memory_space<vmem>>, %arg3: memref<1x4x8x128xf32, #tpu.memory_space<vmem>>, %arg4: memref<1x5x6x2x8x128xf32, #tpu.memory_space<vmem>>, %arg5: memref<1x5x2x2x8x128xf32, #tpu.memory_space<vmem>>, %arg6: memref<1x5x2x8x128xf32, #tpu.memory_space<vmem>>) attributes {dimension_semantics = [#tpu.dimension_semantics<parallel>], iteration_bounds = array<i64: 3>, scalar_prefetch = 1 : i64, scratch_operands = 0 : i64, tpu.core_type = #tpu.core_type<tc>, window_params = [{pipeline_mode = #tpu.pipeline_mode<synchronous>, transform_indices = @transform_0, window_bounds = array<i64: 5, 2, 1, 128>}, {transform_indices = @transform_1, window_bounds = array<i64: 1, 4, 8, 128>}, {transform_indices = @transform_2, window_bounds = array<i64: 1, 5, 6, 2, 8, 128>}, {transform_indices = @transform_3, window_bounds = array<i64: 1, 5, 2, 2, 8, 128>}, {transform_indices = @transform_4, window_bounds = array<i64: 1, 5, 2, 8, 128>}]} {
    %0 = arith.index_cast %arg0 : i32 to index
    %1 = memref.load %arg1[%0] : memref<3xi32, #tpu.memory_space<smem>>
    %2 = arith.sitofp %1 : i32 to f32
    %c0 = arith.constant 0 : index
    %c0_0 = arith.constant 0 : index
    %c0_1 = arith.constant 0 : index
    %c0_2 = arith.constant 0 : index
    %3 = vector.load %arg2[%c0, %c0_0, %c0_1, %c0_2] : memref<5x2x1x128xf32, #tpu.memory_space<vmem>>, vector<1x2x1x128xf32>
    %4 = vector.shape_cast %3 : vector<1x2x1x128xf32> to vector<2x1x128xf32>
    %5 = vector.shape_cast %4 : vector<2x1x128xf32> to vector<2x1x128xf32>
    %6 = vector.broadcast %5 : vector<2x1x128xf32> to vector<2x8x128xf32>
    %c1 = arith.constant 1 : index
    %c0_3 = arith.constant 0 : index
    %c0_4 = arith.constant 0 : index
    %c0_5 = arith.constant 0 : index
    %7 = vector.load %arg2[%c1, %c0_3, %c0_4, %c0_5] : memref<5x2x1x128xf32, #tpu.memory_space<vmem>>, vector<1x2x1x128xf32>
    %8 = vector.shape_cast %7 : vector<1x2x1x128xf32> to vector<2x1x128xf32>
    %9 = vector.broadcast %2 : f32 to vector<2x1x128xf32>
    %10 = arith.mulf %8, %9 : vector<2x1x128xf32>
    %c2 = arith.constant 2 : index
    %c0_6 = arith.constant 0 : index
    %c0_7 = arith.constant 0 : index
    %c0_8 = arith.constant 0 : index
    %11 = vector.load %arg2[%c2, %c0_6, %c0_7, %c0_8] : memref<5x2x1x128xf32, #tpu.memory_space<vmem>>, vector<1x2x1x128xf32>
    %12 = vector.shape_cast %11 : vector<1x2x1x128xf32> to vector<2x1x128xf32>
    %13 = vector.broadcast %2 : f32 to vector<2x1x128xf32>
    %14 = arith.mulf %12, %13 : vector<2x1x128xf32>
    %c3 = arith.constant 3 : index
    %c0_9 = arith.constant 0 : index
    %c0_10 = arith.constant 0 : index
    %c0_11 = arith.constant 0 : index
    %15 = vector.load %arg2[%c3, %c0_9, %c0_10, %c0_11] : memref<5x2x1x128xf32, #tpu.memory_space<vmem>>, vector<1x2x1x128xf32>
    %16 = vector.shape_cast %15 : vector<1x2x1x128xf32> to vector<2x1x128xf32>
    %17 = vector.broadcast %2 : f32 to vector<2x1x128xf32>
    %18 = arith.mulf %16, %17 : vector<2x1x128xf32>
    %c4 = arith.constant 4 : index
    %c0_12 = arith.constant 0 : index
    %c0_13 = arith.constant 0 : index
    %c0_14 = arith.constant 0 : index
    %19 = vector.load %arg2[%c4, %c0_12, %c0_13, %c0_14] : memref<5x2x1x128xf32, #tpu.memory_space<vmem>>, vector<1x2x1x128xf32>
    %20 = vector.shape_cast %19 : vector<1x2x1x128xf32> to vector<2x1x128xf32>
    %21 = vector.broadcast %2 : f32 to vector<2x1x128xf32>
    %22 = arith.mulf %20, %21 : vector<2x1x128xf32>
    %cst = arith.constant 1.000000e+00 : f32
    %23 = vector.broadcast %cst : f32 to vector<2x1x128xf32>
    %24 = arith.divf %23, %18 : vector<2x1x128xf32>
    %cst_15 = arith.constant 1.000000e+00 : f32
    %25 = vector.broadcast %cst_15 : f32 to vector<2x1x128xf32>
    %26 = arith.divf %25, %22 : vector<2x1x128xf32>
    %27 = vector.shape_cast %10 : vector<2x1x128xf32> to vector<2x1x128xf32>
    %28 = vector.broadcast %27 : vector<2x1x128xf32> to vector<2x8x128xf32>
    %29 = vector.shape_cast %14 : vector<2x1x128xf32> to vector<2x1x128xf32>
    %30 = vector.broadcast %29 : vector<2x1x128xf32> to vector<2x8x128xf32>
    %31 = vector.shape_cast %18 : vector<2x1x128xf32> to vector<2x1x128xf32>
    %32 = vector.broadcast %31 : vector<2x1x128xf32> to vector<2x8x128xf32>
    %33 = vector.shape_cast %22 : vector<2x1x128xf32> to vector<2x1x128xf32>
    %34 = vector.broadcast %33 : vector<2x1x128xf32> to vector<2x8x128xf32>
    %c0_16 = arith.constant 0 : index
    %c0_17 = arith.constant 0 : index
    %c0_18 = arith.constant 0 : index
    %c0_19 = arith.constant 0 : index
    %35 = vector.load %arg3[%c0_16, %c0_17, %c0_18, %c0_19] : memref<1x4x8x128xf32, #tpu.memory_space<vmem>>, vector<1x1x8x128xf32>
    %36 = vector.shape_cast %35 : vector<1x1x8x128xf32> to vector<8x128xf32>
    %c0_20 = arith.constant 0 : index
    %c1_21 = arith.constant 1 : index
    %c0_22 = arith.constant 0 : index
    %c0_23 = arith.constant 0 : index
    %37 = vector.load %arg3[%c0_20, %c1_21, %c0_22, %c0_23] : memref<1x4x8x128xf32, #tpu.memory_space<vmem>>, vector<1x1x8x128xf32>
    %38 = vector.shape_cast %37 : vector<1x1x8x128xf32> to vector<8x128xf32>
    %c0_24 = arith.constant 0 : index
    %c2_25 = arith.constant 2 : index
    %c0_26 = arith.constant 0 : index
    %c0_27 = arith.constant 0 : index
    %39 = vector.load %arg3[%c0_24, %c2_25, %c0_26, %c0_27] : memref<1x4x8x128xf32, #tpu.memory_space<vmem>>, vector<1x1x8x128xf32>
    %40 = vector.shape_cast %39 : vector<1x1x8x128xf32> to vector<8x128xf32>
    %c0_28 = arith.constant 0 : index
    %c3_29 = arith.constant 3 : index
    %c0_30 = arith.constant 0 : index
    %c0_31 = arith.constant 0 : index
    %41 = vector.load %arg3[%c0_28, %c3_29, %c0_30, %c0_31] : memref<1x4x8x128xf32, #tpu.memory_space<vmem>>, vector<1x1x8x128xf32>
    %42 = vector.shape_cast %41 : vector<1x1x8x128xf32> to vector<8x128xf32>
    %43 = vector.shape_cast %40 : vector<8x128xf32> to vector<1x8x128xf32>
    %44 = vector.broadcast %43 : vector<1x8x128xf32> to vector<2x8x128xf32>
    %45 = arith.mulf %32, %44 : vector<2x8x128xf32>
    %46 = vector.shape_cast %24 : vector<2x1x128xf32> to vector<2x1x128xf32>
    %47 = vector.broadcast %46 : vector<2x1x128xf32> to vector<2x8x128xf32>
    %48 = vector.shape_cast %36 : vector<8x128xf32> to vector<1x8x128xf32>
    %49 = vector.broadcast %48 : vector<1x8x128xf32> to vector<2x8x128xf32>
    %50 = arith.mulf %49, %47 : vector<2x8x128xf32>
    %51 = arith.maximumf %45, %50 : vector<2x8x128xf32>
    %52 = vector.shape_cast %42 : vector<8x128xf32> to vector<1x8x128xf32>
    %53 = vector.broadcast %52 : vector<1x8x128xf32> to vector<2x8x128xf32>
    %54 = arith.mulf %34, %53 : vector<2x8x128xf32>
    %55 = vector.shape_cast %26 : vector<2x1x128xf32> to vector<2x1x128xf32>
    %56 = vector.broadcast %55 : vector<2x1x128xf32> to vector<2x8x128xf32>
    %57 = vector.shape_cast %38 : vector<8x128xf32> to vector<1x8x128xf32>
    %58 = vector.broadcast %57 : vector<1x8x128xf32> to vector<2x8x128xf32>
    %59 = arith.mulf %58, %56 : vector<2x8x128xf32>
    %60 = arith.maximumf %54, %59 : vector<2x8x128xf32>
    %61 = arith.maximumf %51, %60 : vector<2x8x128xf32>
    %62 = vector.extract_strided_slice %61 {offsets = [0, 0, 0], sizes = [1, 8, 128], strides = [1, 1, 1]} : vector<2x8x128xf32> to vector<1x8x128xf32>
    %63 = vector.shape_cast %62 : vector<1x8x128xf32> to vector<8x128xf32>
    %cst_32 = arith.constant 0.000000e+00 : f32
    %64 = vector.broadcast %cst_32 : f32 to vector<8x128xf32>
    %65 = arith.cmpf one, %63, %64 : vector<8x128xf32>
    %cst_33 = arith.constant 6.550400e+04 : f32
    %66 = vector.broadcast %cst_33 : f32 to vector<8x128xf32>
    %67 = arith.select %65, %63, %66 : vector<8x128xi1>, vector<8x128xf32>
    %cst_34 = arith.constant 4.000000e+00 : f32
    %68 = vector.broadcast %cst_34 : f32 to vector<8x128xf32>
    %69 = arith.cmpf olt, %67, %68 : vector<8x128xf32>
    %70 = vector.shape_cast %69 : vector<8x128xi1> to vector<1x8x128xi1>
    %71 = vector.shape_cast %70 : vector<1x8x128xi1> to vector<1x8x128xi1>
    %72 = vector.broadcast %71 : vector<1x8x128xi1> to vector<2x8x128xi1>
    %73 = tpu.iota {dimensions = array<i32: 1>} : vector<2x8x128xi32>
    %74 = arith.sitofp %73 : vector<2x8x128xi32> to vector<2x8x128xf32>
    %cst_35 = arith.constant 1.000000e+00 : f32
    %75 = vector.broadcast %cst_35 : f32 to vector<2x8x128xf32>
    %76 = arith.addf %74, %75 : vector<2x8x128xf32>
    %cst_36 = arith.constant 0.000000e+00 : f32
    %77 = vector.broadcast %cst_36 : f32 to vector<2x8x128xf32>
    %78 = arith.select %72, %6, %77 : vector<2x8x128xi1>, vector<2x8x128xf32>
    %cst_37 = arith.constant 0.000000e+00 : f32
    %79 = vector.broadcast %cst_37 : f32 to vector<2x8x128xf32>
    %80 = arith.select %72, %28, %79 : vector<2x8x128xi1>, vector<2x8x128xf32>
    %cst_38 = arith.constant 0.000000e+00 : f32
    %81 = vector.broadcast %cst_38 : f32 to vector<2x8x128xf32>
    %82 = arith.select %72, %30, %81 : vector<2x8x128xi1>, vector<2x8x128xf32>
    %cst_39 = arith.constant 0.000000e+00 : f32
    %83 = vector.broadcast %cst_39 : f32 to vector<2x8x128xf32>
    %84 = arith.select %72, %32, %83 : vector<2x8x128xi1>, vector<2x8x128xf32>
    %cst_40 = arith.constant 0.000000e+00 : f32
    %85 = vector.broadcast %cst_40 : f32 to vector<2x8x128xf32>
    %86 = arith.select %72, %34, %85 : vector<2x8x128xi1>, vector<2x8x128xf32>
    %cst_41 = arith.constant 0.000000e+00 : f32
    %87 = vector.broadcast %cst_41 : f32 to vector<2x8x128xf32>
    %88 = arith.select %72, %76, %87 : vector<2x8x128xi1>, vector<2x8x128xf32>
    %cst_42 = arith.constant 0.000000e+00 : f32
    %89 = vector.broadcast %cst_42 : f32 to vector<2x8x128xf32>
    %90 = arith.cmpf one, %80, %89 : vector<2x8x128xf32>
    %91 = vector.broadcast %2 : f32 to vector<2x8x128xf32>
    %92 = arith.subf %91, %80 : vector<2x8x128xf32>
    %cst_43 = arith.constant 0.000000e+00 : f32
    %93 = vector.broadcast %cst_43 : f32 to vector<2x8x128xf32>
    %94 = arith.select %90, %92, %93 : vector<2x8x128xi1>, vector<2x8x128xf32>
    %cst_44 = arith.constant 0.000000e+00 : f32
    %95 = vector.broadcast %cst_44 : f32 to vector<2x8x128xf32>
    %96 = arith.cmpf one, %82, %95 : vector<2x8x128xf32>
    %97 = vector.broadcast %2 : f32 to vector<2x8x128xf32>
    %98 = arith.subf %97, %82 : vector<2x8x128xf32>
    %cst_45 = arith.constant 0.000000e+00 : f32
    %99 = vector.broadcast %cst_45 : f32 to vector<2x8x128xf32>
    %100 = arith.select %96, %98, %99 : vector<2x8x128xi1>, vector<2x8x128xf32>
    %101 = math.floor %80 : vector<2x8x128xf32>
    %102 = arith.subf %80, %101 : vector<2x8x128xf32>
    %cst_46 = arith.constant 5.000000e-01 : f32
    %103 = vector.broadcast %cst_46 : f32 to vector<2x8x128xf32>
    %104 = arith.cmpf olt, %102, %103 : vector<2x8x128xf32>
    %cst_47 = arith.constant 1.000000e+00 : f32
    %105 = vector.broadcast %cst_47 : f32 to vector<2x8x128xf32>
    %106 = arith.cmpf ogt, %80, %105 : vector<2x8x128xf32>
    %107 = arith.andi %104, %106 : vector<2x8x128xi1>
    %108 = math.floor %82 : vector<2x8x128xf32>
    %109 = arith.subf %82, %108 : vector<2x8x128xf32>
    %cst_48 = arith.constant 5.000000e-01 : f32
    %110 = vector.broadcast %cst_48 : f32 to vector<2x8x128xf32>
    %111 = arith.cmpf olt, %109, %110 : vector<2x8x128xf32>
    %cst_49 = arith.constant 1.000000e+00 : f32
    %112 = vector.broadcast %cst_49 : f32 to vector<2x8x128xf32>
    %113 = arith.cmpf ogt, %82, %112 : vector<2x8x128xf32>
    %114 = arith.andi %111, %113 : vector<2x8x128xi1>
    %115 = math.floor %94 : vector<2x8x128xf32>
    %116 = arith.subf %94, %115 : vector<2x8x128xf32>
    %cst_50 = arith.constant 5.000000e-01 : f32
    %117 = vector.broadcast %cst_50 : f32 to vector<2x8x128xf32>
    %118 = arith.cmpf olt, %116, %117 : vector<2x8x128xf32>
    %cst_51 = arith.constant 1.000000e+00 : f32
    %119 = vector.broadcast %cst_51 : f32 to vector<2x8x128xf32>
    %120 = arith.cmpf ogt, %94, %119 : vector<2x8x128xf32>
    %121 = arith.andi %118, %120 : vector<2x8x128xi1>
    %122 = math.floor %100 : vector<2x8x128xf32>
    %123 = arith.subf %100, %122 : vector<2x8x128xf32>
    %cst_52 = arith.constant 5.000000e-01 : f32
    %124 = vector.broadcast %cst_52 : f32 to vector<2x8x128xf32>
    %125 = arith.cmpf olt, %123, %124 : vector<2x8x128xf32>
    %cst_53 = arith.constant 1.000000e+00 : f32
    %126 = vector.broadcast %cst_53 : f32 to vector<2x8x128xf32>
    %127 = arith.cmpf ogt, %100, %126 : vector<2x8x128xf32>
    %128 = arith.andi %125, %127 : vector<2x8x128xi1>
    %true = arith.constant true
    %129 = vector.broadcast %true : i1 to vector<2x8x128xi1>
    %130 = vector.shape_cast %78 : vector<2x8x128xf32> to vector<1x2x8x128xf32>
    %131 = vector.shape_cast %80 : vector<2x8x128xf32> to vector<1x2x8x128xf32>
    %132 = vector.shape_cast %82 : vector<2x8x128xf32> to vector<1x2x8x128xf32>
    %133 = vector.shape_cast %84 : vector<2x8x128xf32> to vector<1x2x8x128xf32>
    %134 = vector.shape_cast %86 : vector<2x8x128xf32> to vector<1x2x8x128xf32>
    %135 = vector.shape_cast %88 : vector<2x8x128xf32> to vector<1x2x8x128xf32>
    %136 = tpu.concatenate %130, %131, %132, %133, %134, %135 in 0 : vector<1x2x8x128xf32>, vector<1x2x8x128xf32>, vector<1x2x8x128xf32>, vector<1x2x8x128xf32>, vector<1x2x8x128xf32>, vector<1x2x8x128xf32> -> vector<6x2x8x128xf32>
    %137 = vector.shape_cast %129 : vector<2x8x128xi1> to vector<1x2x8x128xi1>
    %cst_54 = arith.constant 0.000000e+00 : f32
    %138 = vector.shape_cast %137 : vector<1x2x8x128xi1> to vector<1x2x8x128xi1>
    %139 = vector.broadcast %138 : vector<1x2x8x128xi1> to vector<6x2x8x128xi1>
    %140 = vector.broadcast %cst_54 : f32 to vector<6x2x8x128xf32>
    %141 = arith.select %139, %136, %140 : vector<6x2x8x128xi1>, vector<6x2x8x128xf32>
    %c0_55 = arith.constant 0 : index
    %c0_56 = arith.constant 0 : index
    %c0_57 = arith.constant 0 : index
    %c0_58 = arith.constant 0 : index
    %c0_59 = arith.constant 0 : index
    %c0_60 = arith.constant 0 : index
    %142 = vector.load %arg4[%c0_55, %c0_56, %c0_57, %c0_58, %c0_59, %c0_60] : memref<1x5x6x2x8x128xf32, #tpu.memory_space<vmem>>, vector<1x1x6x2x8x128xf32>
    %143 = vector.shape_cast %142 : vector<1x1x6x2x8x128xf32> to vector<6x2x8x128xf32>
    %144 = vector.shape_cast %141 : vector<6x2x8x128xf32> to vector<1x1x6x2x8x128xf32>
    tpu.vector_store %arg4[%c0_55, %c0_56, %c0_57, %c0_58, %c0_59, %c0_60], %144 {strides = array<i32>} : memref<1x5x6x2x8x128xf32, #tpu.memory_space<vmem>>, vector<1x1x6x2x8x128xf32>,
    %cst_61 = arith.constant dense<0.000000e+00> : vector<2x8x128xf32>
    %145 = vector.multi_reduction <add>, %141, %cst_61 [0] : vector<6x2x8x128xf32> to vector<2x8x128xf32>
    %c0_62 = arith.constant 0 : index
    %c0_63 = arith.constant 0 : index
    %c0_64 = arith.constant 0 : index
    %c0_65 = arith.constant 0 : index
    %c0_66 = arith.constant 0 : index
    %146 = vector.load %arg6[%c0_62, %c0_63, %c0_64, %c0_65, %c0_66] : memref<1x5x2x8x128xf32, #tpu.memory_space<vmem>>, vector<1x1x2x8x128xf32>
    %147 = vector.shape_cast %146 : vector<1x1x2x8x128xf32> to vector<2x8x128xf32>
    %148 = vector.shape_cast %145 : vector<2x8x128xf32> to vector<1x1x2x8x128xf32>
    tpu.vector_store %arg6[%c0_62, %c0_63, %c0_64, %c0_65, %c0_66], %148 {strides = array<i32>} : memref<1x5x2x8x128xf32, #tpu.memory_space<vmem>>, vector<1x1x2x8x128xf32>,
    %cst_67 = arith.constant 0.000000e+00 : f32
    %cst_68 = arith.constant 0.000000e+00 : f32
    %149 = vector.broadcast %cst_67 : f32 to vector<2x8x128xf32>
    %150 = vector.broadcast %cst_68 : f32 to vector<2x8x128xf32>
    %151 = arith.select %129, %149, %150 : vector<2x8x128xi1>, vector<2x8x128xf32>
    %cst_69 = arith.constant 0.000000e+00 : f32
    %cst_70 = arith.constant 0.000000e+00 : f32
    %152 = vector.broadcast %cst_69 : f32 to vector<2x8x128xf32>
    %153 = vector.broadcast %cst_70 : f32 to vector<2x8x128xf32>
    %154 = arith.select %129, %152, %153 : vector<2x8x128xi1>, vector<2x8x128xf32>
    %155 = vector.shape_cast %151 : vector<2x8x128xf32> to vector<1x2x8x128xf32>
    %156 = vector.shape_cast %154 : vector<2x8x128xf32> to vector<1x2x8x128xf32>
    %157 = tpu.concatenate %155, %156 in 0 : vector<1x2x8x128xf32>, vector<1x2x8x128xf32> -> vector<2x2x8x128xf32>
    %c0_71 = arith.constant 0 : index
    %c0_72 = arith.constant 0 : index
    %c0_73 = arith.constant 0 : index
    %c0_74 = arith.constant 0 : index
    %c0_75 = arith.constant 0 : index
    %c0_76 = arith.constant 0 : index
    %158 = vector.load %arg5[%c0_71, %c0_72, %c0_73, %c0_74, %c0_75, %c0_76] : memref<1x5x2x2x8x128xf32, #tpu.memory_space<vmem>>, vector<1x1x2x2x8x128xf32>
    %159 = vector.shape_cast %158 : vector<1x1x2x2x8x128xf32> to vector<2x2x8x128xf32>
    %160 = vector.shape_cast %157 : vector<2x2x8x128xf32> to vector<1x1x2x2x8x128xf32>
    tpu.vector_store %arg5[%c0_71, %c0_72, %c0_73, %c0_74, %c0_75, %c0_76], %160 {strides = array<i32>} : memref<1x5x2x2x8x128xf32, #tpu.memory_space<vmem>>, vector<1x1x2x2x8x128xf32>,
    %161 = vector.shape_cast %107 : vector<2x8x128xi1> to vector<1x2x8x128xi1>
    %cst_77 = arith.constant 0.000000e+00 : f32
    %162 = vector.shape_cast %161 : vector<1x2x8x128xi1> to vector<1x2x8x128xi1>
    %163 = vector.broadcast %162 : vector<1x2x8x128xi1> to vector<6x2x8x128xi1>
    %164 = vector.broadcast %cst_77 : f32 to vector<6x2x8x128xf32>
    %165 = arith.select %163, %136, %164 : vector<6x2x8x128xi1>, vector<6x2x8x128xf32>
    %c0_78 = arith.constant 0 : index
    %c1_79 = arith.constant 1 : index
    %c0_80 = arith.constant 0 : index
    %c0_81 = arith.constant 0 : index
    %c0_82 = arith.constant 0 : index
    %c0_83 = arith.constant 0 : index
    %166 = vector.load %arg4[%c0_78, %c1_79, %c0_80, %c0_81, %c0_82, %c0_83] : memref<1x5x6x2x8x128xf32, #tpu.memory_space<vmem>>, vector<1x1x6x2x8x128xf32>
    %167 = vector.shape_cast %166 : vector<1x1x6x2x8x128xf32> to vector<6x2x8x128xf32>
    %168 = vector.shape_cast %165 : vector<6x2x8x128xf32> to vector<1x1x6x2x8x128xf32>
    tpu.vector_store %arg4[%c0_78, %c1_79, %c0_80, %c0_81, %c0_82, %c0_83], %168 {strides = array<i32>} : memref<1x5x6x2x8x128xf32, #tpu.memory_space<vmem>>, vector<1x1x6x2x8x128xf32>,
    %cst_84 = arith.constant dense<0.000000e+00> : vector<2x8x128xf32>
    %169 = vector.multi_reduction <add>, %165, %cst_84 [0] : vector<6x2x8x128xf32> to vector<2x8x128xf32>
    %c0_85 = arith.constant 0 : index
    %c1_86 = arith.constant 1 : index
    %c0_87 = arith.constant 0 : index
    %c0_88 = arith.constant 0 : index
    %c0_89 = arith.constant 0 : index
    %170 = vector.load %arg6[%c0_85, %c1_86, %c0_87, %c0_88, %c0_89] : memref<1x5x2x8x128xf32, #tpu.memory_space<vmem>>, vector<1x1x2x8x128xf32>
    %171 = vector.shape_cast %170 : vector<1x1x2x8x128xf32> to vector<2x8x128xf32>
    %172 = vector.shape_cast %169 : vector<2x8x128xf32> to vector<1x1x2x8x128xf32>
    tpu.vector_store %arg6[%c0_85, %c1_86, %c0_87, %c0_88, %c0_89], %172 {strides = array<i32>} : memref<1x5x2x8x128xf32, #tpu.memory_space<vmem>>, vector<1x1x2x8x128xf32>,
    %cst_90 = arith.constant 5.000000e-01 : f32
    %cst_91 = arith.constant 0.000000e+00 : f32
    %173 = vector.broadcast %cst_90 : f32 to vector<2x8x128xf32>
    %174 = vector.broadcast %cst_91 : f32 to vector<2x8x128xf32>
    %175 = arith.select %107, %173, %174 : vector<2x8x128xi1>, vector<2x8x128xf32>
    %cst_92 = arith.constant 0.000000e+00 : f32
    %cst_93 = arith.constant 0.000000e+00 : f32
    %176 = vector.broadcast %cst_92 : f32 to vector<2x8x128xf32>
    %177 = vector.broadcast %cst_93 : f32 to vector<2x8x128xf32>
    %178 = arith.select %107, %176, %177 : vector<2x8x128xi1>, vector<2x8x128xf32>
    %179 = vector.shape_cast %175 : vector<2x8x128xf32> to vector<1x2x8x128xf32>
    %180 = vector.shape_cast %178 : vector<2x8x128xf32> to vector<1x2x8x128xf32>
    %181 = tpu.concatenate %179, %180 in 0 : vector<1x2x8x128xf32>, vector<1x2x8x128xf32> -> vector<2x2x8x128xf32>
    %c0_94 = arith.constant 0 : index
    %c1_95 = arith.constant 1 : index
    %c0_96 = arith.constant 0 : index
    %c0_97 = arith.constant 0 : index
    %c0_98 = arith.constant 0 : index
    %c0_99 = arith.constant 0 : index
    %182 = vector.load %arg5[%c0_94, %c1_95, %c0_96, %c0_97, %c0_98, %c0_99] : memref<1x5x2x2x8x128xf32, #tpu.memory_space<vmem>>, vector<1x1x2x2x8x128xf32>
    %183 = vector.shape_cast %182 : vector<1x1x2x2x8x128xf32> to vector<2x2x8x128xf32>
    %184 = vector.shape_cast %181 : vector<2x2x8x128xf32> to vector<1x1x2x2x8x128xf32>
    tpu.vector_store %arg5[%c0_94, %c1_95, %c0_96, %c0_97, %c0_98, %c0_99], %184 {strides = array<i32>} : memref<1x5x2x2x8x128xf32, #tpu.memory_space<vmem>>, vector<1x1x2x2x8x128xf32>,
    %185 = vector.shape_cast %114 : vector<2x8x128xi1> to vector<1x2x8x128xi1>
    %cst_100 = arith.constant 0.000000e+00 : f32
    %186 = vector.shape_cast %185 : vector<1x2x8x128xi1> to vector<1x2x8x128xi1>
    %187 = vector.broadcast %186 : vector<1x2x8x128xi1> to vector<6x2x8x128xi1>
    %188 = vector.broadcast %cst_100 : f32 to vector<6x2x8x128xf32>
    %189 = arith.select %187, %136, %188 : vector<6x2x8x128xi1>, vector<6x2x8x128xf32>
    %c0_101 = arith.constant 0 : index
    %c2_102 = arith.constant 2 : index
    %c0_103 = arith.constant 0 : index
    %c0_104 = arith.constant 0 : index
    %c0_105 = arith.constant 0 : index
    %c0_106 = arith.constant 0 : index
    %190 = vector.load %arg4[%c0_101, %c2_102, %c0_103, %c0_104, %c0_105, %c0_106] : memref<1x5x6x2x8x128xf32, #tpu.memory_space<vmem>>, vector<1x1x6x2x8x128xf32>
    %191 = vector.shape_cast %190 : vector<1x1x6x2x8x128xf32> to vector<6x2x8x128xf32>
    %192 = vector.shape_cast %189 : vector<6x2x8x128xf32> to vector<1x1x6x2x8x128xf32>
    tpu.vector_store %arg4[%c0_101, %c2_102, %c0_103, %c0_104, %c0_105, %c0_106], %192 {strides = array<i32>} : memref<1x5x6x2x8x128xf32, #tpu.memory_space<vmem>>, vector<1x1x6x2x8x128xf32>,
    %cst_107 = arith.constant dense<0.000000e+00> : vector<2x8x128xf32>
    %193 = vector.multi_reduction <add>, %189, %cst_107 [0] : vector<6x2x8x128xf32> to vector<2x8x128xf32>
    %c0_108 = arith.constant 0 : index
    %c2_109 = arith.constant 2 : index
    %c0_110 = arith.constant 0 : index
    %c0_111 = arith.constant 0 : index
    %c0_112 = arith.constant 0 : index
    %194 = vector.load %arg6[%c0_108, %c2_109, %c0_110, %c0_111, %c0_112] : memref<1x5x2x8x128xf32, #tpu.memory_space<vmem>>, vector<1x1x2x8x128xf32>
    %195 = vector.shape_cast %194 : vector<1x1x2x8x128xf32> to vector<2x8x128xf32>
    %196 = vector.shape_cast %193 : vector<2x8x128xf32> to vector<1x1x2x8x128xf32>
    tpu.vector_store %arg6[%c0_108, %c2_109, %c0_110, %c0_111, %c0_112], %196 {strides = array<i32>} : memref<1x5x2x8x128xf32, #tpu.memory_space<vmem>>, vector<1x1x2x8x128xf32>,
    %cst_113 = arith.constant 0.000000e+00 : f32
    %cst_114 = arith.constant 0.000000e+00 : f32
    %197 = vector.broadcast %cst_113 : f32 to vector<2x8x128xf32>
    %198 = vector.broadcast %cst_114 : f32 to vector<2x8x128xf32>
    %199 = arith.select %114, %197, %198 : vector<2x8x128xi1>, vector<2x8x128xf32>
    %cst_115 = arith.constant 5.000000e-01 : f32
    %cst_116 = arith.constant 0.000000e+00 : f32
    %200 = vector.broadcast %cst_115 : f32 to vector<2x8x128xf32>
    %201 = vector.broadcast %cst_116 : f32 to vector<2x8x128xf32>
    %202 = arith.select %114, %200, %201 : vector<2x8x128xi1>, vector<2x8x128xf32>
    %203 = vector.shape_cast %199 : vector<2x8x128xf32> to vector<1x2x8x128xf32>
    %204 = vector.shape_cast %202 : vector<2x8x128xf32> to vector<1x2x8x128xf32>
    %205 = tpu.concatenate %203, %204 in 0 : vector<1x2x8x128xf32>, vector<1x2x8x128xf32> -> vector<2x2x8x128xf32>
    %c0_117 = arith.constant 0 : index
    %c2_118 = arith.constant 2 : index
    %c0_119 = arith.constant 0 : index
    %c0_120 = arith.constant 0 : index
    %c0_121 = arith.constant 0 : index
    %c0_122 = arith.constant 0 : index
    %206 = vector.load %arg5[%c0_117, %c2_118, %c0_119, %c0_120, %c0_121, %c0_122] : memref<1x5x2x2x8x128xf32, #tpu.memory_space<vmem>>, vector<1x1x2x2x8x128xf32>
    %207 = vector.shape_cast %206 : vector<1x1x2x2x8x128xf32> to vector<2x2x8x128xf32>
    %208 = vector.shape_cast %205 : vector<2x2x8x128xf32> to vector<1x1x2x2x8x128xf32>
    tpu.vector_store %arg5[%c0_117, %c2_118, %c0_119, %c0_120, %c0_121, %c0_122], %208 {strides = array<i32>} : memref<1x5x2x2x8x128xf32, #tpu.memory_space<vmem>>, vector<1x1x2x2x8x128xf32>,
    %209 = vector.shape_cast %121 : vector<2x8x128xi1> to vector<1x2x8x128xi1>
    %cst_123 = arith.constant 0.000000e+00 : f32
    %210 = vector.shape_cast %209 : vector<1x2x8x128xi1> to vector<1x2x8x128xi1>
    %211 = vector.broadcast %210 : vector<1x2x8x128xi1> to vector<6x2x8x128xi1>
    %212 = vector.broadcast %cst_123 : f32 to vector<6x2x8x128xf32>
    %213 = arith.select %211, %136, %212 : vector<6x2x8x128xi1>, vector<6x2x8x128xf32>
    %c0_124 = arith.constant 0 : index
    %c3_125 = arith.constant 3 : index
    %c0_126 = arith.constant 0 : index
    %c0_127 = arith.constant 0 : index
    %c0_128 = arith.constant 0 : index
    %c0_129 = arith.constant 0 : index
    %214 = vector.load %arg4[%c0_124, %c3_125, %c0_126, %c0_127, %c0_128, %c0_129] : memref<1x5x6x2x8x128xf32, #tpu.memory_space<vmem>>, vector<1x1x6x2x8x128xf32>
    %215 = vector.shape_cast %214 : vector<1x1x6x2x8x128xf32> to vector<6x2x8x128xf32>
    %216 = vector.shape_cast %213 : vector<6x2x8x128xf32> to vector<1x1x6x2x8x128xf32>
    tpu.vector_store %arg4[%c0_124, %c3_125, %c0_126, %c0_127, %c0_128, %c0_129], %216 {strides = array<i32>} : memref<1x5x6x2x8x128xf32, #tpu.memory_space<vmem>>, vector<1x1x6x2x8x128xf32>,
    %cst_130 = arith.constant dense<0.000000e+00> : vector<2x8x128xf32>
    %217 = vector.multi_reduction <add>, %213, %cst_130 [0] : vector<6x2x8x128xf32> to vector<2x8x128xf32>
    %c0_131 = arith.constant 0 : index
    %c3_132 = arith.constant 3 : index
    %c0_133 = arith.constant 0 : index
    %c0_134 = arith.constant 0 : index
    %c0_135 = arith.constant 0 : index
    %218 = vector.load %arg6[%c0_131, %c3_132, %c0_133, %c0_134, %c0_135] : memref<1x5x2x8x128xf32, #tpu.memory_space<vmem>>, vector<1x1x2x8x128xf32>
    %219 = vector.shape_cast %218 : vector<1x1x2x8x128xf32> to vector<2x8x128xf32>
    %220 = vector.shape_cast %217 : vector<2x8x128xf32> to vector<1x1x2x8x128xf32>
    tpu.vector_store %arg6[%c0_131, %c3_132, %c0_133, %c0_134, %c0_135], %220 {strides = array<i32>} : memref<1x5x2x8x128xf32, #tpu.memory_space<vmem>>, vector<1x1x2x8x128xf32>,
    %cst_136 = arith.constant -5.000000e-01 : f32
    %cst_137 = arith.constant 0.000000e+00 : f32
    %221 = vector.broadcast %cst_136 : f32 to vector<2x8x128xf32>
    %222 = vector.broadcast %cst_137 : f32 to vector<2x8x128xf32>
    %223 = arith.select %121, %221, %222 : vector<2x8x128xi1>, vector<2x8x128xf32>
    %cst_138 = arith.constant 0.000000e+00 : f32
    %cst_139 = arith.constant 0.000000e+00 : f32
    %224 = vector.broadcast %cst_138 : f32 to vector<2x8x128xf32>
    %225 = vector.broadcast %cst_139 : f32 to vector<2x8x128xf32>
    %226 = arith.select %121, %224, %225 : vector<2x8x128xi1>, vector<2x8x128xf32>
    %227 = vector.shape_cast %223 : vector<2x8x128xf32> to vector<1x2x8x128xf32>
    %228 = vector.shape_cast %226 : vector<2x8x128xf32> to vector<1x2x8x128xf32>
    %229 = tpu.concatenate %227, %228 in 0 : vector<1x2x8x128xf32>, vector<1x2x8x128xf32> -> vector<2x2x8x128xf32>
    %c0_140 = arith.constant 0 : index
    %c3_141 = arith.constant 3 : index
    %c0_142 = arith.constant 0 : index
    %c0_143 = arith.constant 0 : index
    %c0_144 = arith.constant 0 : index
    %c0_145 = arith.constant 0 : index
    %230 = vector.load %arg5[%c0_140, %c3_141, %c0_142, %c0_143, %c0_144, %c0_145] : memref<1x5x2x2x8x128xf32, #tpu.memory_space<vmem>>, vector<1x1x2x2x8x128xf32>
    %231 = vector.shape_cast %230 : vector<1x1x2x2x8x128xf32> to vector<2x2x8x128xf32>
    %232 = vector.shape_cast %229 : vector<2x2x8x128xf32> to vector<1x1x2x2x8x128xf32>
    tpu.vector_store %arg5[%c0_140, %c3_141, %c0_142, %c0_143, %c0_144, %c0_145], %232 {strides = array<i32>} : memref<1x5x2x2x8x128xf32, #tpu.memory_space<vmem>>, vector<1x1x2x2x8x128xf32>,
    %233 = vector.shape_cast %128 : vector<2x8x128xi1> to vector<1x2x8x128xi1>
    %cst_146 = arith.constant 0.000000e+00 : f32
    %234 = vector.shape_cast %233 : vector<1x2x8x128xi1> to vector<1x2x8x128xi1>
    %235 = vector.broadcast %234 : vector<1x2x8x128xi1> to vector<6x2x8x128xi1>
    %236 = vector.broadcast %cst_146 : f32 to vector<6x2x8x128xf32>
    %237 = arith.select %235, %136, %236 : vector<6x2x8x128xi1>, vector<6x2x8x128xf32>
    %c0_147 = arith.constant 0 : index
    %c4_148 = arith.constant 4 : index
    %c0_149 = arith.constant 0 : index
    %c0_150 = arith.constant 0 : index
    %c0_151 = arith.constant 0 : index
    %c0_152 = arith.constant 0 : index
    %238 = vector.load %arg4[%c0_147, %c4_148, %c0_149, %c0_150, %c0_151, %c0_152] : memref<1x5x6x2x8x128xf32, #tpu.memory_space<vmem>>, vector<1x1x6x2x8x128xf32>
    %239 = vector.shape_cast %238 : vector<1x1x6x2x8x128xf32> to vector<6x2x8x128xf32>
    %240 = vector.shape_cast %237 : vector<6x2x8x128xf32> to vector<1x1x6x2x8x128xf32>
    tpu.vector_store %arg4[%c0_147, %c4_148, %c0_149, %c0_150, %c0_151, %c0_152], %240 {strides = array<i32>} : memref<1x5x6x2x8x128xf32, #tpu.memory_space<vmem>>, vector<1x1x6x2x8x128xf32>,
    %cst_153 = arith.constant dense<0.000000e+00> : vector<2x8x128xf32>
    %241 = vector.multi_reduction <add>, %237, %cst_153 [0] : vector<6x2x8x128xf32> to vector<2x8x128xf32>
    %c0_154 = arith.constant 0 : index
    %c4_155 = arith.constant 4 : index
    %c0_156 = arith.constant 0 : index
    %c0_157 = arith.constant 0 : index
    %c0_158 = arith.constant 0 : index
    %242 = vector.load %arg6[%c0_154, %c4_155, %c0_156, %c0_157, %c0_158] : memref<1x5x2x8x128xf32, #tpu.memory_space<vmem>>, vector<1x1x2x8x128xf32>
    %243 = vector.shape_cast %242 : vector<1x1x2x8x128xf32> to vector<2x8x128xf32>
    %244 = vector.shape_cast %241 : vector<2x8x128xf32> to vector<1x1x2x8x128xf32>
    tpu.vector_store %arg6[%c0_154, %c4_155, %c0_156, %c0_157, %c0_158], %244 {strides = array<i32>} : memref<1x5x2x8x128xf32, #tpu.memory_space<vmem>>, vector<1x1x2x8x128xf32>,
    %cst_159 = arith.constant 0.000000e+00 : f32
    %cst_160 = arith.constant 0.000000e+00 : f32
    %245 = vector.broadcast %cst_159 : f32 to vector<2x8x128xf32>
    %246 = vector.broadcast %cst_160 : f32 to vector<2x8x128xf32>
    %247 = arith.select %128, %245, %246 : vector<2x8x128xi1>, vector<2x8x128xf32>
    %cst_161 = arith.constant -5.000000e-01 : f32
    %cst_162 = arith.constant 0.000000e+00 : f32
    %248 = vector.broadcast %cst_161 : f32 to vector<2x8x128xf32>
    %249 = vector.broadcast %cst_162 : f32 to vector<2x8x128xf32>
    %250 = arith.select %128, %248, %249 : vector<2x8x128xi1>, vector<2x8x128xf32>
    %251 = vector.shape_cast %247 : vector<2x8x128xf32> to vector<1x2x8x128xf32>
    %252 = vector.shape_cast %250 : vector<2x8x128xf32> to vector<1x2x8x128xf32>
    %253 = tpu.concatenate %251, %252 in 0 : vector<1x2x8x128xf32>, vector<1x2x8x128xf32> -> vector<2x2x8x128xf32>
    %c0_163 = arith.constant 0 : index
    %c4_164 = arith.constant 4 : index
    %c0_165 = arith.constant 0 : index
    %c0_166 = arith.constant 0 : index
    %c0_167 = arith.constant 0 : index
    %c0_168 = arith.constant 0 : index
    %254 = vector.load %arg5[%c0_163, %c4_164, %c0_165, %c0_166, %c0_167, %c0_168] : memref<1x5x2x2x8x128xf32, #tpu.memory_space<vmem>>, vector<1x1x2x2x8x128xf32>
    %255 = vector.shape_cast %254 : vector<1x1x2x2x8x128xf32> to vector<2x2x8x128xf32>
    %256 = vector.shape_cast %253 : vector<2x2x8x128xf32> to vector<1x1x2x2x8x128xf32>
    tpu.vector_store %arg5[%c0_163, %c4_164, %c0_165, %c0_166, %c0_167, %c0_168], %256 {strides = array<i32>} : memref<1x5x2x2x8x128xf32, #tpu.memory_space<vmem>>, vector<1x1x2x2x8x128xf32>,
    return
  }
  func.func @transform_0(%arg0: i32, %arg1: memref<3xi32, #tpu.memory_space<smem>>) -> (i32, i32, i32, i32) {
    %c0_i32 = arith.constant 0 : i32
    %c0_i32_0 = arith.constant 0 : i32
    %c0_i32_1 = arith.constant 0 : i32
    %c0_i32_2 = arith.constant 0 : i32
    %c0_i32_3 = arith.constant 0 : i32
    return %c0_i32, %c0_i32_0, %c0_i32_1, %c0_i32_2 : i32, i32, i32, i32
  }
  func.func @transform_1(%arg0: i32, %arg1: memref<3xi32, #tpu.memory_space<smem>>) -> (i32, i32, i32, i32) {
    %c0_i32 = arith.constant 0 : i32
    %c0_i32_0 = arith.constant 0 : i32
    %c0_i32_1 = arith.constant 0 : i32
    %c0_i32_2 = arith.constant 0 : i32
    return %arg0, %c0_i32, %c0_i32_0, %c0_i32_1 : i32, i32, i32, i32
  }
  func.func @transform_2(%arg0: i32, %arg1: memref<3xi32, #tpu.memory_space<smem>>) -> (i32, i32, i32, i32, i32, i32) {
    %c0_i32 = arith.constant 0 : i32
    %c0_i32_0 = arith.constant 0 : i32
    %c0_i32_1 = arith.constant 0 : i32
    %c0_i32_2 = arith.constant 0 : i32
    %c0_i32_3 = arith.constant 0 : i32
    %c0_i32_4 = arith.constant 0 : i32
    return %arg0, %c0_i32, %c0_i32_0, %c0_i32_1, %c0_i32_2, %c0_i32_3 : i32, i32, i32, i32, i32, i32
  }
  func.func @transform_3(%arg0: i32, %arg1: memref<3xi32, #tpu.memory_space<smem>>) -> (i32, i32, i32, i32, i32, i32) {
    %c0_i32 = arith.constant 0 : i32
    %c0_i32_0 = arith.constant 0 : i32
    %c0_i32_1 = arith.constant 0 : i32
    %c0_i32_2 = arith.constant 0 : i32
    %c0_i32_3 = arith.constant 0 : i32
    %c0_i32_4 = arith.constant 0 : i32
    return %arg0, %c0_i32, %c0_i32_0, %c0_i32_1, %c0_i32_2, %c0_i32_3 : i32, i32, i32, i32, i32, i32
  }
  func.func @transform_4(%arg0: i32, %arg1: memref<3xi32, #tpu.memory_space<smem>>) -> (i32, i32, i32, i32, i32) {
    %c0_i32 = arith.constant 0 : i32
    %c0_i32_0 = arith.constant 0 : i32
    %c0_i32_1 = arith.constant 0 : i32
    %c0_i32_2 = arith.constant 0 : i32
    %c0_i32_3 = arith.constant 0 : i32
    return %arg0, %c0_i32, %c0_i32_0, %c0_i32_1, %c0_i32_2 : i32, i32, i32, i32, i32
  }
}

</mosaic_0001>

<llo_original>
// kernel: _forward.1
$region0: #{_forward.1}
  #allocation0 [shape = 'u32[]', space=smem, size = 0x4, offset = 0x4, fixed_abs, tag = 'smem constant byte address 0x4 - core index']
  #allocation1 [shape = 'u32[144,128]{1,0:T(1,128)}', space=vmem, size = 0x12000, scoped, tag = 'internal scratch']
  #allocation2 [shape = 's32[1]{0}', space=sflag, size = 0x4, scoped, tag = 'scoped memory for _forward.1']
  #allocation3 [shape = 'u8[512]{0}', space=smem, size = 0x200, scoped, tag = 'prefetched SMEM operand 0']
  %s0 = inlined_call_operand.hbm [shape: s32[3], index: 0, kind: input, shape index: {}]
  %s1 = inlined_call_operand.vmem [shape: f32[5,2,1,128], index: 1, kind: input, shape index: {}]
  %s2 = inlined_call_operand.vmem [shape: f32[3,4,8,128], index: 2, kind: input, shape index: {}]
  %s3 = inlined_call_operand.vmem [shape: f32[3,5,6,2,8,128], index: 3, kind: output, shape index: {0}]
  %s4 = inlined_call_operand.vmem [shape: f32[3,5,2,2,8,128], index: 4, kind: output, shape index: {1}]
  %s5 = inlined_call_operand.vmem [shape: f32[3,5,2,8,128], index: 5, kind: output, shape index: {2}]
  %6 = xla_tuple %s3, %s4, %s5
  %s7 = sld [smem:[#allocation0]]
  $region57: #{_forward.1} parent=0
    _
  %s9 = ssub.s32 1, %s7
  %s10 = scalar_select 0, %s9, %s7
  %12 = dma.hbm_to_smem %s0, 16, [#allocation3], [#allocation2]
  %13 = dma.done [#allocation2], 16
  %14 = sfence
  loop: start=0, step=1, limit=5
  $region2: #{_forward.1} parent=0 // loop_pre_header
    _
  $region3: #{_forward.1} parent=0 // loop_header
    %s16 = sphi 0, %s20
    %p17 = scmp.ge.s32.totalorder %s16, 5
    %s24 = sphi 0, %s24
    %s26 = sphi 0, %s24
    %s27 = sphi 0, %s26
    %s41 = sphi 0, %s27
    %s47 = sphi 0, %s49
    %s50 = sphi 0, %s47
    %s51 = sphi 0, %s50
    %s67 = sphi 0, %s51
    %s73 = sphi 0, %s75
    %s76 = sphi 0, %s73
    %s77 = sphi 0, %s76
    %s93 = sphi 0, %s77
    %s99 = sphi 0, %s101
    %s102 = sphi 0, %s99
    %s103 = sphi 0, %s102
    %s119 = sphi 0, %s103
    %s125 = sphi 0, %s127
    %s128 = sphi 0, %s125
    %s129 = sphi 0, %s128
    %s145 = sphi 0, %s129
  $region4: #{_forward.1} parent=0 // loop_header_branch
    %19 = sbr.rel (%p17) target = $region8
  $region5: #{_forward.1} parent=0 // loop_body
    %s21 = ssub.s32 %s16, 1
    %s22 = ssub.s32 %s16, 2
    %s23 = sadd.s32 %s16, 1
    %s25 = sadd.s32 %s24, 1
    %p28 = scmp.eq.s32.totalorder %s16, 2
    %p29 = scmp.ne.s32.totalorder %s24, %s26
    %p30 = scmp.eq.s32.totalorder %s16, 0
    %p31 = por %p29, %p30
    %p32 = scmp.ne.s32.totalorder %s24, %s26
    %p33 = scmp.eq.s32.totalorder %s21, 2
    %p34 = por %p32, %p33
    %p35 = scmp.ne.s32.totalorder %s26, %s27
    %p36 = scmp.eq.s32.totalorder %s21, 0
    %p37 = por %p35, %p36
    %p38 = scmp.ne.s32.totalorder %s26, %s27
    %p39 = scmp.eq.s32.totalorder %s22, 2
    %p40 = por %p38, %p39
    %p42 = scmp.ne.s32.totalorder %s27, %s41
    %p43 = scmp.eq.s32.totalorder %s22, 0
    %p44 = por %p42, %p43
    %s45 = ssub.s32 %s16, %s23
    %p46 = scmp.eq.s32.totalorder %s45, 0
    %s48 = sadd.s32 %s47, 1
    %s49 = scalar_select %p46, %s47, %s48
    %p52 = pneg %p46
    %p53 = scmp.eq.s32.totalorder %s16, 2
    %p54 = por %p52, %p53
    %p55 = scmp.ne.s32.totalorder %s47, %s50
    %p56 = scmp.eq.s32.totalorder %s16, 0
    %p57 = por %p55, %p56
    %p58 = scmp.ne.s32.totalorder %s47, %s50
    %p59 = scmp.eq.s32.totalorder %s21, 2
    %p60 = por %p58, %p59
    %p61 = scmp.ne.s32.totalorder %s50, %s51
    %p62 = scmp.eq.s32.totalorder %s21, 0
    %p63 = por %p61, %p62
    %p64 = scmp.ne.s32.totalorder %s50, %s51
    %p65 = scmp.eq.s32.totalorder %s22, 2
    %p66 = por %p64, %p65
    %p68 = scmp.ne.s32.totalorder %s51, %s67
    %p69 = scmp.eq.s32.totalorder %s22, 0
    %p70 = por %p68, %p69
    %s71 = ssub.s32 %s16, %s23
    %p72 = scmp.eq.s32.totalorder %s71, 0
    %s74 = sadd.s32 %s73, 1
    %s75 = scalar_select %p72, %s73, %s74
    %p78 = pneg %p72
    %p79 = scmp.eq.s32.totalorder %s16, 2
    %p80 = por %p78, %p79
    %p81 = scmp.ne.s32.totalorder %s73, %s76
    %p82 = scmp.eq.s32.totalorder %s16, 0
    %p83 = por %p81, %p82
    %p84 = scmp.ne.s32.totalorder %s73, %s76
    %p85 = scmp.eq.s32.totalorder %s21, 2
    %p86 = por %p84, %p85
    %p87 = scmp.ne.s32.totalorder %s76, %s77
    %p88 = scmp.eq.s32.totalorder %s21, 0
    %p89 = por %p87, %p88
    %p90 = scmp.ne.s32.totalorder %s76, %s77
    %p91 = scmp.eq.s32.totalorder %s22, 2
    %p92 = por %p90, %p91
    %p94 = scmp.ne.s32.totalorder %s77, %s93
    %p95 = scmp.eq.s32.totalorder %s22, 0
    %p96 = por %p94, %p95
    %s97 = ssub.s32 %s16, %s23
    %p98 = scmp.eq.s32.totalorder %s97, 0
    %s100 = sadd.s32 %s99, 1
    %s101 = scalar_select %p98, %s99, %s100
    %p104 = pneg %p98
    %p105 = scmp.eq.s32.totalorder %s16, 2
    %p106 = por %p104, %p105
    %p107 = scmp.ne.s32.totalorder %s99, %s102
    %p108 = scmp.eq.s32.totalorder %s16, 0
    %p109 = por %p107, %p108
    %p110 = scmp.ne.s32.totalorder %s99, %s102
    %p111 = scmp.eq.s32.totalorder %s21, 2
    %p112 = por %p110, %p111
    %p113 = scmp.ne.s32.totalorder %s102, %s103
    %p114 = scmp.eq.s32.totalorder %s21, 0
    %p115 = por %p113, %p114
    %p116 = scmp.ne.s32.totalorder %s102, %s103
    %p117 = scmp.eq.s32.totalorder %s22, 2
    %p118 = por %p116, %p117
    %p120 = scmp.ne.s32.totalorder %s103, %s119
    %p121 = scmp.eq.s32.totalorder %s22, 0
    %p122 = por %p120, %p121
    %s123 = ssub.s32 %s16, %s23
    %p124 = scmp.eq.s32.totalorder %s123, 0
    %s126 = sadd.s32 %s125, 1
    %s127 = scalar_select %p124, %s125, %s126
    %p130 = pneg %p124
    %p131 = scmp.eq.s32.totalorder %s16, 2
    %p132 = por %p130, %p131
    %p133 = scmp.ne.s32.totalorder %s125, %s128
    %p134 = scmp.eq.s32.totalorder %s16, 0
    %p135 = por %p133, %p134
    %p136 = scmp.ne.s32.totalorder %s125, %s128
    %p137 = scmp.eq.s32.totalorder %s21, 2
    %p138 = por %p136, %p137
    %p139 = scmp.ne.s32.totalorder %s128, %s129
    %p140 = scmp.eq.s32.totalorder %s21, 0
    %p141 = por %p139, %p140
    %p142 = scmp.ne.s32.totalorder %s128, %s129
    %p143 = scmp.eq.s32.totalorder %s22, 2
    %p144 = por %p142, %p143
    %p146 = scmp.ne.s32.totalorder %s129, %s145
    %p147 = scmp.eq.s32.totalorder %s22, 0
    %p148 = por %p146, %p147
    %p149 = scmp.le.s32.totalorder 1, %s16
    %p150 = scmp.lt.s32.totalorder %s16, 4
    %p151 = pnand %p149, %p150
    %p152 = pneg %p151
    // Predicated region
    $region9: #{_forward.1} parent=5 // pred_check
      _
    $region10: #{_forward.1} parent=5 // pred_check_branch
      %154 = sbr.rel (%p151) target = $region12
    $region11: #{_forward.1} parent=5 // pred_region
      %s155 = ssub.s32 %s16, 1
      // Predicated region
      $region13: #{_forward.1} parent=11 // pred_check
        %p156 = pneg %p37
      $region14: #{_forward.1} parent=11 // pred_check_branch
        %158 = sbr.rel (%p156) target = $region16
      $region15: #{_forward.1} parent=11 // pred_region
        _
      $region16: #{_forward.1} parent=11 // pred_fallthru
        _
    $region12: #{_forward.1} parent=5 // pred_fallthru
      _
    %p159 = scmp.lt.s32.totalorder %s16, 3
    // Predicated region
    $region17: #{_forward.1} parent=5 // pred_check
      %p160 = pneg %p159
    $region18: #{_forward.1} parent=5 // pred_check_branch
      %162 = sbr.rel (%p160) target = $region20
    $region19: #{_forward.1} parent=5 // pred_region
      // Predicated region
      $region21: #{_forward.1} parent=19 // pred_check
        %p163 = pneg %p57
      $region22: #{_forward.1} parent=19 // pred_check_branch
        %165 = sbr.rel (%p163) target = $region24
      $region23: #{_forward.1} parent=19 // pred_region
        %p166 = scmp.lt.s32.totalorder %s16, 2
        %s167 = scalar_select %p166, %s16, 2
        %s168 = smul.addr %s167, 4
        %s169 = smul.addr %s168, 8
        %s170 = scalar_lea.vmem %s2, %s169
      $region24: #{_forward.1} parent=19 // pred_fallthru
        _
    $region20: #{_forward.1} parent=5 // pred_fallthru
      _
    %p171 = scmp.le.s32.totalorder 1, %s16
    %p172 = scmp.lt.s32.totalorder %s16, 4
    %p173 = pnand %p171, %p172
    %p174 = pneg %p173
    // Predicated region
    $region25: #{_forward.1} parent=5 // pred_check
      _
    $region26: #{_forward.1} parent=5 // pred_check_branch
      %176 = sbr.rel (%p173) target = $region28
    $region27: #{_forward.1} parent=5 // pred_region
      %s177 = ssub.s32 %s16, 1
      %p178 = pneg %p37
      %p179 = pneg %p34
      %p180 = scmp.lt.s32.totalorder %s21, 2
      %s181 = scalar_select %p180, %s21, 2
      %s182 = smul.addr %s181, 4
      %s183 = smul.addr %s182, 8
      %s184 = scalar_lea.vmem %s2, %s183
      %p185 = pneg %p63
      %p186 = pneg %p60
      %p187 = pneg %p89
      %p188 = pneg %p86
      %p189 = scmp.lt.s32.totalorder %s21, 2
      %s190 = scalar_select %p189, %s21, 2
      %s191 = smul.addr %s190, 60
      %s192 = smul.addr %s191, 8
      %s193 = scalar_lea.vmem %s3, %s192
      %p194 = pneg %p115
      %p195 = pneg %p112
      %p196 = scmp.lt.s32.totalorder %s21, 2
      %s197 = scalar_select %p196, %s21, 2
      %s198 = smul.addr %s197, 20
      %s199 = smul.addr %s198, 8
      %s200 = scalar_lea.vmem %s4, %s199
      %p201 = pneg %p141
      %p202 = pneg %p138
      %p203 = scmp.lt.s32.totalorder %s21, 2
      %s204 = scalar_select %p203, %s21, 2
      %s205 = smul.addr %s204, 10
      %s206 = smul.addr %s205, 8
      %s207 = scalar_lea.vmem %s5, %s206
      %p208 = scmp.lt.s32.totalorder %s21, 2
      %s209 = scalar_select %p208, %s21, 2
      %s210 = smul.addr %s209, 4
      %s211 = smul.addr %s210, 8
      %s212 = scalar_lea.vmem %s2, %s211
      %p213 = scmp.lt.s32.totalorder %s21, 2
      %s214 = scalar_select %p213, %s21, 2
      %s215 = smul.addr %s214, 60
      %s216 = smul.addr %s215, 8
      %s217 = scalar_lea.vmem %s3, %s216
      %p218 = scmp.lt.s32.totalorder %s21, 2
      %s219 = scalar_select %p218, %s21, 2
      %s220 = smul.addr %s219, 20
      %s221 = smul.addr %s220, 8
      %s222 = scalar_lea.vmem %s4, %s221
      %p223 = scmp.lt.s32.totalorder %s21, 2
      %s224 = scalar_select %p223, %s21, 2
      %s225 = smul.addr %s224, 10
      %s226 = smul.addr %s225, 8
      %s227 = scalar_lea.vmem %s5, %s226
      %s228 = sld [smem:[#allocation3 + %s21]]
      %s229 = scvt.s32.f32 %s228
      %v230 = vld [vmem:[%s1] sm:$0x1]
      %v231 = vld [vmem:[%s1 + $0x1] sm:$0x1]
      %v234 = vlaneseq
      %v235 = vshrl.u32 %v234, 7
      %v236 = vsub.s32 0, %v235
      %v237 = vrot.slane %v230, %v236
      %v238 = vlaneseq
      %v239 = vshrl.u32 %v238, 7
      %v240 = vsub.s32 0, %v239
      %v241 = vrot.slane %v231, %v240
      %s244 = scalar_lea.vmem %s1, 2
      %v245 = vld [vmem:[%s244] sm:$0x1]
      %v246 = vld [vmem:[%s244 + $0x1] sm:$0x1]
      %v247 = vstv %s229
      %v248 = vmul.f32 %v245, %v247
      %v249 = vmul.f32 %v246, %v247
      %s250 = scalar_lea.vmem %s1, 4
      %v251 = vld [vmem:[%s250] sm:$0x1]
      %v252 = vld [vmem:[%s250 + $0x1] sm:$0x1]
      %v253 = vmul.f32 %v251, %v247
      %v254 = vmul.f32 %v252, %v247
      %s255 = scalar_lea.vmem %s1, 6
      %v256 = vld [vmem:[%s255] sm:$0x1]
      %v257 = vld [vmem:[%s255 + $0x1] sm:$0x1]
      %v258 = vmul.f32 %v256, %v247
      %v259 = vmul.f32 %v257, %v247
      %s260 = scalar_lea.vmem %s1, 8
      %v261 = vld [vmem:[%s260] sm:$0x1]
      %v262 = vld [vmem:[%s260 + $0x1] sm:$0x1]
      %v263 = vmul.f32 %v261, %v247
      %v264 = vmul.f32 %v262, %v247
      %v265 = vrcp.pop %v258
      %v266 = vmul.f32 1.0, %v265
      %v267 = vrcp.pop %v263
      %v268 = vmul.f32 1.0, %v267
      %v271 = vlaneseq
      %v272 = vshrl.u32 %v271, 7
      %v273 = vsub.s32 0, %v272
      %v274 = vrot.slane %v248, %v273
      %v275 = vlaneseq
      %v276 = vshrl.u32 %v275, 7
      %v277 = vsub.s32 0, %v276
      %v278 = vrot.slane %v249, %v277
      %v283 = vlaneseq
      %v284 = vshrl.u32 %v283, 7
      %v285 = vsub.s32 0, %v284
      %v286 = vrot.slane %v253, %v285
      %v287 = vlaneseq
      %v288 = vshrl.u32 %v287, 7
      %v289 = vsub.s32 0, %v288
      %v290 = vrot.slane %v254, %v289
      %v295 = vlaneseq
      %v296 = vshrl.u32 %v295, 7
      %v297 = vsub.s32 0, %v296
      %v298 = vrot.slane %v258, %v297
      %v299 = vlaneseq
      %v300 = vshrl.u32 %v299, 7
      %v301 = vsub.s32 0, %v300
      %v302 = vrot.slane %v259, %v301
      %v307 = vlaneseq
      %v308 = vshrl.u32 %v307, 7
      %v309 = vsub.s32 0, %v308
      %v310 = vrot.slane %v263, %v309
      %v311 = vlaneseq
      %v312 = vshrl.u32 %v311, 7
      %v313 = vsub.s32 0, %v312
      %v314 = vrot.slane %v264, %v313
      %v317 = vld [vmem:[%s212] sm:$0xff]
      %s318 = scalar_lea.vmem %s212, 8
      %v319 = vld [vmem:[%s318] sm:$0xff]
      %s320 = scalar_lea.vmem %s212, 16
      %v321 = vld [vmem:[%s320] sm:$0xff]
      %s322 = scalar_lea.vmem %s212, 24
      %v323 = vld [vmem:[%s322] sm:$0xff]
      %v324 = vmul.f32 %v298, %v321
      %v326 = vlaneseq
      %v327 = vshrl.u32 %v326, 7
      %v328 = vsub.s32 0, %v327
      %v329 = vrot.slane %v266, %v328
      %v331 = vmul.f32 %v317, %v329
      %v332 = vmax.f32 %v324, %v331
      %v333 = vmul.f32 %v310, %v323
      %v335 = vlaneseq
      %v336 = vshrl.u32 %v335, 7
      %v337 = vsub.s32 0, %v336
      %v338 = vrot.slane %v268, %v337
      %v340 = vmul.f32 %v319, %v338
      %v341 = vmax.f32 %v333, %v340
      %v342 = vmax.f32 %v332, %v341
      %vm343 = vcmp.ne.f32.partialorder %v342, 0.0
      %v344 = vsel %vm343, %v342, 65504.0
      %vm345 = vcmp.lt.f32.partialorder %v344, 4.0
      %v346 = vsel %vm345, 1, 0
      %vm347 = vcmp.eq.s32.totalorder %v346, 1
      %v348 = vlaneseq
      %v349 = vshrl.u32 %v348, 7
      %v350 = vcvt.s32.f32 %v349
      %v351 = vadd.f32 %v350, 1.0
      %v352 = vsel %vm347, %v237, 0.0
      %v353 = vsel %vm347, %v241, 0.0
      %v354 = vsel %vm347, %v274, 0.0
      %v355 = vsel %vm347, %v278, 0.0
      %v356 = vsel %vm347, %v286, 0.0
      %v357 = vsel %vm347, %v290, 0.0
      %v358 = vsel %vm347, %v298, 0.0
      %v359 = vsel %vm347, %v302, 0.0
      %v360 = vsel %vm347, %v310, 0.0
      %v361 = vsel %vm347, %v314, 0.0
      %v362 = vsel %vm347, %v351, 0.0
      %vm363 = vcmp.ne.f32.partialorder %v354, 0.0
      %vm364 = vcmp.ne.f32.partialorder %v355, 0.0
      %v365 = vsub.f32 %v247, %v354
      %v366 = vsub.f32 %v247, %v355
      %v367 = vsel %vm363, %v365, 0.0
      %v368 = vsel %vm364, %v366, 0.0
      %vm369 = vcmp.ne.f32.partialorder %v356, 0.0
      %vm370 = vcmp.ne.f32.partialorder %v357, 0.0
      %v371 = vsub.f32 %v247, %v356
      %v372 = vsub.f32 %v247, %v357
      %v373 = vsel %vm369, %v371, 0.0
      %v374 = vsel %vm370, %v372, 0.0
      %v375 = vfloor.f32 %v354
      %v376 = vfloor.f32 %v355
      %v377 = vsub.f32 %v354, %v375
      %v378 = vsub.f32 %v355, %v376
      %vm379 = vcmp.lt.f32.partialorder %v377, 0.5
      %vm380 = vcmp.lt.f32.partialorder %v378, 0.5
      %vm381 = vcmp.gt.f32.partialorder %v354, 1.0
      %vm382 = vcmp.gt.f32.partialorder %v355, 1.0
      %vm383 = vmand %vm379, %vm381
      %vm384 = vmand %vm380, %vm382
      %v385 = vfloor.f32 %v356
      %v386 = vfloor.f32 %v357
      %v387 = vsub.f32 %v356, %v385
      %v388 = vsub.f32 %v357, %v386
      %vm389 = vcmp.lt.f32.partialorder %v387, 0.5
      %vm390 = vcmp.lt.f32.partialorder %v388, 0.5
      %vm391 = vcmp.gt.f32.partialorder %v356, 1.0
      %vm392 = vcmp.gt.f32.partialorder %v357, 1.0
      %vm393 = vmand %vm389, %vm391
      %vm394 = vmand %vm390, %vm392
      %v395 = vfloor.f32 %v367
      %v396 = vfloor.f32 %v368
      %v397 = vsub.f32 %v367, %v395
      %v398 = vsub.f32 %v368, %v396
      %vm399 = vcmp.lt.f32.partialorder %v397, 0.5
      %vm400 = vcmp.lt.f32.partialorder %v398, 0.5
      %vm401 = vcmp.gt.f32.partialorder %v367, 1.0
      %vm402 = vcmp.gt.f32.partialorder %v368, 1.0
      %vm403 = vmand %vm399, %vm401
      %vm404 = vmand %vm400, %vm402
      %v405 = vfloor.f32 %v373
      %v406 = vfloor.f32 %v374
      %v407 = vsub.f32 %v373, %v405
      %v408 = vsub.f32 %v374, %v406
      %vm409 = vcmp.lt.f32.partialorder %v407, 0.5
      %vm410 = vcmp.lt.f32.partialorder %v408, 0.5
      %vm411 = vcmp.gt.f32.partialorder %v373, 1.0
      %vm412 = vcmp.gt.f32.partialorder %v374, 1.0
      %vm413 = vmand %vm409, %vm411
      %vm414 = vmand %vm410, %vm412
      %415 = vst [vmem:[%s217] sm:$0xff] %v352
      %416 = vst [vmem:[%s217 + $0x8] sm:$0xff] %v353
      %417 = vst [vmem:[%s217 + $0x10] sm:$0xff] %v354
      %418 = vst [vmem:[%s217 + $0x18] sm:$0xff] %v355
      %419 = vst [vmem:[%s217 + $0x20] sm:$0xff] %v356
      %420 = vst [vmem:[%s217 + $0x28] sm:$0xff] %v357
      %421 = vst [vmem:[%s217 + $0x30] sm:$0xff] %v358
      %422 = vst [vmem:[%s217 + $0x38] sm:$0xff] %v359
      %423 = vst [vmem:[%s217 + $0x40] sm:$0xff] %v360
      %424 = vst [vmem:[%s217 + $0x48] sm:$0xff] %v361
      %425 = vst [vmem:[%s217 + $0x50] sm:$0xff] %v362
      %426 = vst [vmem:[%s217 + $0x58] sm:$0xff] %v362
      %v427 = vadd.f32 %v352, %v354
      %v428 = vadd.f32 %v427, %v356
      %v429 = vadd.f32 %v428, %v358
      %v430 = vadd.f32 %v429, %v360
      %v431 = vadd.f32 %v430, %v362
      %v432 = vadd.f32 %v353, %v355
      %v433 = vadd.f32 %v432, %v357
      %v434 = vadd.f32 %v433, %v359
      %v435 = vadd.f32 %v434, %v361
      %v436 = vadd.f32 %v435, %v362
      %437 = vst [vmem:[%s227] sm:$0xff] %v431
      %438 = vst [vmem:[%s227 + $0x8] sm:$0xff] %v436
      %439 = vst [vmem:[%s222] sm:$0xff] 0.0
      %440 = vst [vmem:[%s222 + $0x8] sm:$0xff] 0.0
      %441 = vst [vmem:[%s222 + $0x10] sm:$0xff] 0.0
      %442 = vst [vmem:[%s222 + $0x18] sm:$0xff] 0.0
      %v443 = vsel %vm383, 1, 0
      %v444 = vsel %vm384, 1, 0
      %vm445 = vcmp.eq.s32.totalorder %v443, 1
      %vm446 = vcmp.eq.s32.totalorder %v444, 1
      %v447 = vsel %vm445, %v352, 0.0
      %v448 = vsel %vm446, %v353, 0.0
      %v449 = vsel %vm445, %v354, 0.0
      %v450 = vsel %vm446, %v355, 0.0
      %v451 = vsel %vm445, %v356, 0.0
      %v452 = vsel %vm446, %v357, 0.0
      %v453 = vsel %vm445, %v358, 0.0
      %v454 = vsel %vm446, %v359, 0.0
      %v455 = vsel %vm445, %v360, 0.0
      %v456 = vsel %vm446, %v361, 0.0
      %v457 = vsel %vm445, %v362, 0.0
      %v458 = vsel %vm446, %v362, 0.0
      %s459 = scalar_lea.vmem %s217, 96
      %460 = vst [vmem:[%s459] sm:$0xff] %v447
      %461 = vst [vmem:[%s459 + $0x8] sm:$0xff] %v448
      %462 = vst [vmem:[%s459 + $0x10] sm:$0xff] %v449
      %463 = vst [vmem:[%s459 + $0x18] sm:$0xff] %v450
      %464 = vst [vmem:[%s459 + $0x20] sm:$0xff] %v451
      %465 = vst [vmem:[%s459 + $0x28] sm:$0xff] %v452
      %466 = vst [vmem:[%s459 + $0x30] sm:$0xff] %v453
      %467 = vst [vmem:[%s459 + $0x38] sm:$0xff] %v454
      %468 = vst [vmem:[%s459 + $0x40] sm:$0xff] %v455
      %469 = vst [vmem:[%s459 + $0x48] sm:$0xff] %v456
      %470 = vst [vmem:[%s459 + $0x50] sm:$0xff] %v457
      %471 = vst [vmem:[%s459 + $0x58] sm:$0xff] %v458
      %v472 = vadd.f32 %v447, %v449
      %v473 = vadd.f32 %v472, %v451
      %v474 = vadd.f32 %v473, %v453
      %v475 = vadd.f32 %v474, %v455
      %v476 = vadd.f32 %v475, %v457
      %v477 = vadd.f32 %v448, %v450
      %v478 = vadd.f32 %v477, %v452
      %v479 = vadd.f32 %v478, %v454
      %v480 = vadd.f32 %v479, %v456
      %v481 = vadd.f32 %v480, %v458
      %s482 = scalar_lea.vmem %s227, 16
      %483 = vst [vmem:[%s482] sm:$0xff] %v476
      %484 = vst [vmem:[%s482 + $0x8] sm:$0xff] %v481
      %v485 = vsel %vm383, 0.5, 0.0
      %v486 = vsel %vm384, 0.5, 0.0
      %s487 = scalar_lea.vmem %s222, 32
      %488 = vst [vmem:[%s487] sm:$0xff] %v485
      %489 = vst [vmem:[%s487 + $0x8] sm:$0xff] %v486
      %490 = vst [vmem:[%s487 + $0x10] sm:$0xff] 0.0
      %491 = vst [vmem:[%s487 + $0x18] sm:$0xff] 0.0
      %v492 = vsel %vm393, 1, 0
      %v493 = vsel %vm394, 1, 0
      %vm494 = vcmp.eq.s32.totalorder %v492, 1
      %vm495 = vcmp.eq.s32.totalorder %v493, 1
      %v496 = vsel %vm494, %v352, 0.0
      %v497 = vsel %vm495, %v353, 0.0
      %v498 = vsel %vm494, %v354, 0.0
      %v499 = vsel %vm495, %v355, 0.0
      %v500 = vsel %vm494, %v356, 0.0
      %v501 = vsel %vm495, %v357, 0.0
      %v502 = vsel %vm494, %v358, 0.0
      %v503 = vsel %vm495, %v359, 0.0
      %v504 = vsel %vm494, %v360, 0.0
      %v505 = vsel %vm495, %v361, 0.0
      %v506 = vsel %vm494, %v362, 0.0
      %v507 = vsel %vm495, %v362, 0.0
      %s508 = scalar_lea.vmem %s217, 192
      %509 = vst [vmem:[%s508] sm:$0xff] %v496
      %510 = vst [vmem:[%s508 + $0x8] sm:$0xff] %v497
      %511 = vst [vmem:[%s508 + $0x10] sm:$0xff] %v498
      %512 = vst [vmem:[%s508 + $0x18] sm:$0xff] %v499
      %513 = vst [vmem:[%s508 + $0x20] sm:$0xff] %v500
      %514 = vst [vmem:[%s508 + $0x28] sm:$0xff] %v501
      %515 = vst [vmem:[%s508 + $0x30] sm:$0xff] %v502
      %516 = vst [vmem:[%s508 + $0x38] sm:$0xff] %v503
      %517 = vst [vmem:[%s508 + $0x40] sm:$0xff] %v504
      %518 = vst [vmem:[%s508 + $0x48] sm:$0xff] %v505
      %519 = vst [vmem:[%s508 + $0x50] sm:$0xff] %v506
      %520 = vst [vmem:[%s508 + $0x58] sm:$0xff] %v507
      %v521 = vadd.f32 %v496, %v498
      %v522 = vadd.f32 %v521, %v500
      %v523 = vadd.f32 %v522, %v502
      %v524 = vadd.f32 %v523, %v504
      %v525 = vadd.f32 %v524, %v506
      %v526 = vadd.f32 %v497, %v499
      %v527 = vadd.f32 %v526, %v501
      %v528 = vadd.f32 %v527, %v503
      %v529 = vadd.f32 %v528, %v505
      %v530 = vadd.f32 %v529, %v507
      %s531 = scalar_lea.vmem %s227, 32
      %532 = vst [vmem:[%s531] sm:$0xff] %v525
      %533 = vst [vmem:[%s531 + $0x8] sm:$0xff] %v530
      %v534 = vsel %vm393, 0.5, 0.0
      %v535 = vsel %vm394, 0.5, 0.0
      %s536 = scalar_lea.vmem %s222, 64
      %537 = vst [vmem:[%s536] sm:$0xff] 0.0
      %538 = vst [vmem:[%s536 + $0x8] sm:$0xff] 0.0
      %539 = vst [vmem:[%s536 + $0x10] sm:$0xff] %v534
      %540 = vst [vmem:[%s536 + $0x18] sm:$0xff] %v535
      %v541 = vsel %vm403, 1, 0
      %v542 = vsel %vm404, 1, 0
      %vm543 = vcmp.eq.s32.totalorder %v541, 1
      %vm544 = vcmp.eq.s32.totalorder %v542, 1
      %v545 = vsel %vm543, %v352, 0.0
      %v546 = vsel %vm544, %v353, 0.0
      %v547 = vsel %vm543, %v354, 0.0
      %v548 = vsel %vm544, %v355, 0.0
      %v549 = vsel %vm543, %v356, 0.0
      %v550 = vsel %vm544, %v357, 0.0
      %v551 = vsel %vm543, %v358, 0.0
      %v552 = vsel %vm544, %v359, 0.0
      %v553 = vsel %vm543, %v360, 0.0
      %v554 = vsel %vm544, %v361, 0.0
      %v555 = vsel %vm543, %v362, 0.0
      %v556 = vsel %vm544, %v362, 0.0
      %s557 = scalar_lea.vmem %s217, 288
      %558 = vst [vmem:[%s557] sm:$0xff] %v545
      %559 = vst [vmem:[%s557 + $0x8] sm:$0xff] %v546
      %560 = vst [vmem:[%s557 + $0x10] sm:$0xff] %v547
      %561 = vst [vmem:[%s557 + $0x18] sm:$0xff] %v548
      %562 = vst [vmem:[%s557 + $0x20] sm:$0xff] %v549
      %563 = vst [vmem:[%s557 + $0x28] sm:$0xff] %v550
      %564 = vst [vmem:[%s557 + $0x30] sm:$0xff] %v551
      %565 = vst [vmem:[%s557 + $0x38] sm:$0xff] %v552
      %566 = vst [vmem:[%s557 + $0x40] sm:$0xff] %v553
      %567 = vst [vmem:[%s557 + $0x48] sm:$0xff] %v554
      %568 = vst [vmem:[%s557 + $0x50] sm:$0xff] %v555
      %569 = vst [vmem:[%s557 + $0x58] sm:$0xff] %v556
      %v570 = vadd.f32 %v545, %v547
      %v571 = vadd.f32 %v570, %v549
      %v572 = vadd.f32 %v571, %v551
      %v573 = vadd.f32 %v572, %v553
      %v574 = vadd.f32 %v573, %v555
      %v575 = vadd.f32 %v546, %v548
      %v576 = vadd.f32 %v575, %v550
      %v577 = vadd.f32 %v576, %v552
      %v578 = vadd.f32 %v577, %v554
      %v579 = vadd.f32 %v578, %v556
      %s580 = scalar_lea.vmem %s227, 48
      %581 = vst [vmem:[%s580] sm:$0xff] %v574
      %582 = vst [vmem:[%s580 + $0x8] sm:$0xff] %v579
      %v583 = vsel %vm403, -0.5, 0.0
      %v584 = vsel %vm404, -0.5, 0.0
      %s585 = scalar_lea.vmem %s222, 96
      %586 = vst [vmem:[%s585] sm:$0xff] %v583
      %587 = vst [vmem:[%s585 + $0x8] sm:$0xff] %v584
      %588 = vst [vmem:[%s585 + $0x10] sm:$0xff] 0.0
      %589 = vst [vmem:[%s585 + $0x18] sm:$0xff] 0.0
      %v590 = vsel %vm413, 1, 0
      %v591 = vsel %vm414, 1, 0
      %vm592 = vcmp.eq.s32.totalorder %v590, 1
      %vm593 = vcmp.eq.s32.totalorder %v591, 1
      %v594 = vsel %vm592, %v352, 0.0
      %v595 = vsel %vm593, %v353, 0.0
      %v596 = vsel %vm592, %v354, 0.0
      %v597 = vsel %vm593, %v355, 0.0
      %v598 = vsel %vm592, %v356, 0.0
      %v599 = vsel %vm593, %v357, 0.0
      %v600 = vsel %vm592, %v358, 0.0
      %v601 = vsel %vm593, %v359, 0.0
      %v602 = vsel %vm592, %v360, 0.0
      %v603 = vsel %vm593, %v361, 0.0
      %v604 = vsel %vm592, %v362, 0.0
      %v605 = vsel %vm593, %v362, 0.0
      %s606 = scalar_lea.vmem %s217, 384
      %607 = vst [vmem:[%s606] sm:$0xff] %v594
      %608 = vst [vmem:[%s606 + $0x8] sm:$0xff] %v595
      %609 = vst [vmem:[%s606 + $0x10] sm:$0xff] %v596
      %610 = vst [vmem:[%s606 + $0x18] sm:$0xff] %v597
      %611 = vst [vmem:[%s606 + $0x20] sm:$0xff] %v598
      %612 = vst [vmem:[%s606 + $0x28] sm:$0xff] %v599
      %613 = vst [vmem:[%s606 + $0x30] sm:$0xff] %v600
      %614 = vst [vmem:[%s606 + $0x38] sm:$0xff] %v601
      %615 = vst [vmem:[%s606 + $0x40] sm:$0xff] %v602
      %616 = vst [vmem:[%s606 + $0x48] sm:$0xff] %v603
      %617 = vst [vmem:[%s606 + $0x50] sm:$0xff] %v604
      %618 = vst [vmem:[%s606 + $0x58] sm:$0xff] %v605
      %v619 = vadd.f32 %v594, %v596
      %v620 = vadd.f32 %v619, %v598
      %v621 = vadd.f32 %v620, %v600
      %v622 = vadd.f32 %v621, %v602
      %v623 = vadd.f32 %v622, %v604
      %v624 = vadd.f32 %v595, %v597
      %v625 = vadd.f32 %v624, %v599
      %v626 = vadd.f32 %v625, %v601
      %v627 = vadd.f32 %v626, %v603
      %v628 = vadd.f32 %v627, %v605
      %s629 = scalar_lea.vmem %s227, 64
      %630 = vst [vmem:[%s629] sm:$0xff] %v623
      %631 = vst [vmem:[%s629 + $0x8] sm:$0xff] %v628
      %v632 = vsel %vm413, -0.5, 0.0
      %v633 = vsel %vm414, -0.5, 0.0
      %s634 = scalar_lea.vmem %s222, 128
      %635 = vst [vmem:[%s634] sm:$0xff] 0.0
      %636 = vst [vmem:[%s634 + $0x8] sm:$0xff] 0.0
      %637 = vst [vmem:[%s634 + $0x10] sm:$0xff] %v632
      %638 = vst [vmem:[%s634 + $0x18] sm:$0xff] %v633
      %p639 = scmp.lt.s32.totalorder %s21, 2
      %s640 = scalar_select %p639, %s21, 2
      %s641 = smul.addr %s640, 60
      %s642 = smul.addr %s641, 8
      %s643 = scalar_lea.vmem %s3, %s642
      %p644 = scmp.lt.s32.totalorder %s21, 2
      %s645 = scalar_select %p644, %s21, 2
      %s646 = smul.addr %s645, 20
      %s647 = smul.addr %s646, 8
      %s648 = scalar_lea.vmem %s4, %s647
      %p649 = scmp.lt.s32.totalorder %s21, 2
      %s650 = scalar_select %p649, %s21, 2
      %s651 = smul.addr %s650, 10
      %s652 = smul.addr %s651, 8
      %s653 = scalar_lea.vmem %s5, %s652
      // Predicated region
      $region29: #{_forward.1} parent=27 // pred_check
        %p654 = pneg %p86
      $region30: #{_forward.1} parent=27 // pred_check_branch
        %656 = sbr.rel (%p654) target = $region32
      $region31: #{_forward.1} parent=27 // pred_region
        _
      $region32: #{_forward.1} parent=27 // pred_fallthru
        _
      // Predicated region
      $region33: #{_forward.1} parent=27 // pred_check
        %p657 = pneg %p112
      $region34: #{_forward.1} parent=27 // pred_check_branch
        %659 = sbr.rel (%p657) target = $region36
      $region35: #{_forward.1} parent=27 // pred_region
        _
      $region36: #{_forward.1} parent=27 // pred_fallthru
        _
      // Predicated region
      $region37: #{_forward.1} parent=27 // pred_check
        %p660 = pneg %p138
      $region38: #{_forward.1} parent=27 // pred_check_branch
        %662 = sbr.rel (%p660) target = $region40
      $region39: #{_forward.1} parent=27 // pred_region
        _
      $region40: #{_forward.1} parent=27 // pred_fallthru
        _
    $region28: #{_forward.1} parent=5 // pred_fallthru
      _
    %p663 = scmp.le.s32.totalorder 2, %s16
    // Predicated region
    $region41: #{_forward.1} parent=5 // pred_check
      %p664 = pneg %p663
    $region42: #{_forward.1} parent=5 // pred_check_branch
      %666 = sbr.rel (%p664) target = $region44
    $region43: #{_forward.1} parent=5 // pred_region
      %s667 = ssub.s32 %s16, 2
      // Predicated region
      $region45: #{_forward.1} parent=43 // pred_check
        %p668 = pneg %p92
      $region46: #{_forward.1} parent=43 // pred_check_branch
        %670 = sbr.rel (%p668) target = $region48
      $region47: #{_forward.1} parent=43 // pred_region
        %p671 = scmp.lt.s32.totalorder %s22, 2
        %s672 = scalar_select %p671, %s22, 2
        %s673 = smul.addr %s672, 60
        %s674 = smul.addr %s673, 8
        %s675 = scalar_lea.vmem %s3, %s674
      $region48: #{_forward.1} parent=43 // pred_fallthru
        _
      // Predicated region
      $region49: #{_forward.1} parent=43 // pred_check
        %p676 = pneg %p118
      $region50: #{_forward.1} parent=43 // pred_check_branch
        %678 = sbr.rel (%p676) target = $region52
      $region51: #{_forward.1} parent=43 // pred_region
        %p679 = scmp.lt.s32.totalorder %s22, 2
        %s680 = scalar_select %p679, %s22, 2
        %s681 = smul.addr %s680, 20
        %s682 = smul.addr %s681, 8
        %s683 = scalar_lea.vmem %s4, %s682
      $region52: #{_forward.1} parent=43 // pred_fallthru
        _
      // Predicated region
      $region53: #{_forward.1} parent=43 // pred_check
        %p684 = pneg %p144
      $region54: #{_forward.1} parent=43 // pred_check_branch
        %686 = sbr.rel (%p684) target = $region56
      $region55: #{_forward.1} parent=43 // pred_region
        %p687 = scmp.lt.s32.totalorder %s22, 2
        %s688 = scalar_select %p687, %s22, 2
        %s689 = smul.addr %s688, 10
        %s690 = smul.addr %s689, 8
        %s691 = scalar_lea.vmem %s5, %s690
      $region56: #{_forward.1} parent=43 // pred_fallthru
        _
    $region44: #{_forward.1} parent=5 // pred_fallthru
      _
  $region6: #{_forward.1} parent=0 // loop_footer
    %s20 = sadd.s32 1, %s16
  $region7: #{_forward.1} parent=0 // loop_footer_branch
    %15 = sbr.rel target = $region3
  $region8: #{_forward.1} parent=0 // loop_exit
    _

</llo_original>
